<compile_context>
chip_gen: v7x
topology: tpu7x:2x2x1
jax: 0.10.0
libtpu: 0.0.40
codegen_flags: <defaults>
</compile_context>

<pallas_src>
import numpy as np
import jax
import jax.numpy as jnp
from jax.experimental import pallas as pl
from jax.experimental.pallas import tpu as pltpu


def bilinear_matrix(out_size: int, in_size: int) -> np.ndarray:
    """Row-stochastic (out_size, in_size) matrix reproducing torch
    F.interpolate(mode='bilinear', align_corners=False) along one axis."""
    scale = in_size / out_size
    i = np.arange(out_size, dtype=np.float64)
    src = (i + 0.5) * scale - 0.5
    src = np.clip(src, 0.0, None)                 # PyTorch clamps negative coords
    i0 = np.minimum(np.floor(src).astype(np.int64), in_size - 1)
    i1 = np.minimum(i0 + 1, in_size - 1)
    frac = src - i0
    m = np.zeros((out_size, in_size), dtype=np.float64)
    m[np.arange(out_size), i0] += 1.0 - frac
    m[np.arange(out_size), i1] += frac
    return m.astype(np.float32)


def _fuse_block_sum_kernel(xl_ref, xh_ref, w1_ref, b1_ref, w2_ref, b2_ref,
                           mt_ref, o_ref, ker_sc):
    # xl_ref : (1, C, t_sp)  bf16  flattened-spatial tile of x_l (lane-dense)
    # xh_ref : (1, C, h*w)   bf16  full low-res image (resident per batch)
    # w1/w2  : (O, C)        bf16  1x1 conv weights with BN scale folded in
    # b1/b2  : (O, 1)        f32   folded BN bias
    # mt_ref : (h*w, t_sp)   bf16  column slice of kron(mh, mw).T
    # o_ref  : (1, O, t_sp)  f32
    # ker_sc : (O, h*w)      bf16  VMEM scratch, carried across spatial tiles

    # Hoisted tile-invariant low-res path: fuse2 conv (+BN), once per batch.
    @pl.when(pl.program_id(1) == 0)
    def _():
        ker = jnp.dot(w2_ref[...], xh_ref[0],
                      preferred_element_type=jnp.float32) + b2_ref[...]
        ker_sc[...] = ker.astype(ker_sc.dtype)

    # fuse1: 1x1 conv (+BN) on this spatial tile of x_l.
    inp = jnp.dot(w1_ref[...], xl_ref[0],
                  preferred_element_type=jnp.float32) + b1_ref[...]       # (O, t_sp)

    # Bilinear upsample (align_corners=False) for this tile as ONE matmul
    # against the Kronecker interpolation matrix — no transposes, output is
    # already in the lane-dense (O, t_sp) layout.
    feat = jnp.dot(ker_sc[...], mt_ref[...],
                   preferred_element_type=jnp.float32)                    # (O, t_sp)

    o_ref[0] = (inp + feat).astype(o_ref.dtype)


def _pick_tile_sp(S, C, O, s, budget_bytes=24 << 20):
    """Largest lane-aligned (multiple of 128) divisor of S=H*W whose streamed
    working set fits the budget.  Accounting per spatial column:
      double-buffered streams: x_l (bf16) + out (f32) + MT slice (bf16),
      plus ~3 f32 (O,) intermediates (inp, feat, sum) held in vregs/VMEM."""
    per_col = 2 * (C * 2 + O * 4 + s * 2) + 3 * O * 4
    aligned = [d for d in range(128, S + 1, 128) if S % d == 0]
    if not aligned:
        return S                      # no lane-aligned divisor: single full block
    fits = [d for d in aligned if d * per_col <= budget_bytes]
    return max(fits) if fits else min(aligned)


def fuse_block_sum(x_l, x_h, params, *, tile_sp=None, out_dtype=jnp.float32):
    """x_l: (B, C, H, W); x_h: (B, C, h, w), NCHW.  Returns (B, O, H, W)."""
    B, C, H, W = x_l.shape
    _, _, h, w = x_h.shape
    O = params['w1f'].shape[0]
    S, s = H * W, h * w

    # Channels-first throughout: only free reshapes here, no HBM transposes.
    # bf16 storage/DMA for the heavy streams; accumulation stays f32 in-kernel.
    xl = x_l.reshape(B, C, S).astype(jnp.bfloat16)
    xh = x_h.reshape(B, C, s).astype(jnp.bfloat16)
    w1 = params['w1f'].astype(jnp.bfloat16)
    w2 = params['w2f'].astype(jnp.bfloat16)
    b1 = params['b1'].astype(jnp.float32)
    b2 = params['b2'].astype(jnp.float32)

    # Separable bilinear weights fused into one Kronecker matrix (h*w, H*W).
    mh = bilinear_matrix(H, h)
    mw = bilinear_matrix(W, w)
    mt = jnp.asarray(np.kron(mh, mw).T).astype(jnp.bfloat16)

    if tile_sp is None:
        tile_sp = _pick_tile_sp(S, C, O, s)
    assert S % tile_sp == 0, "tile_sp must divide H*W"
    n_sp = S // tile_sp

    const = lambda shp: pl.BlockSpec(shp, lambda b, i: (0, 0))

    out_bytes = np.dtype(out_dtype).itemsize
    flops = 2 * B * O * C * (S + s) + 2 * B * O * s * S
    bytes_accessed = (B * C * S * 2 + B * C * s * 2 + B * s * S * 2
                      + 2 * O * C * 2 + 2 * O * 4 + B * O * S * out_bytes)

    out = pl.pallas_call(
        _fuse_block_sum_kernel,
        out_shape=jax.ShapeDtypeStruct((B, O, S), out_dtype),
        grid_spec=pltpu.PrefetchScalarGridSpec(
            num_scalar_prefetch=0,
            grid=(B, n_sp),
            in_specs=[
                pl.BlockSpec((1, C, tile_sp), lambda b, i: (b, 0, i)),   # x_l tile
                pl.BlockSpec((1, C, s), lambda b, i: (b, 0, 0)),         # x_h (per-batch resident)
                const((O, C)), const((O, 1)),                            # fuse1 w/b
                const((O, C)), const((O, 1)),                            # fuse2 w/b
                pl.BlockSpec((s, tile_sp), lambda b, i: (0, i)),         # kron matrix slice
            ],
            out_specs=pl.BlockSpec((1, O, tile_sp), lambda b, i: (b, 0, i)),
            scratch_shapes=[pltpu.VMEM((O, s), jnp.bfloat16)],           # hoisted fuse2 result
        ),
        compiler_params=pltpu.CompilerParams(
            # Axis 1 carries the per-batch scratch -> "arbitrary"; megacore
            # parallelism comes from the batch axis.
            dimension_semantics=("parallel", "arbitrary"),
            vmem_limit_bytes=48 << 20),
        cost_estimate=pl.CostEstimate(flops=flops, transcendentals=0,
                                      bytes_accessed=bytes_accessed),
    )(xl, xh, w1, b1, w2, b2, mt)

    return out.reshape(B, O, H, W)


def make_params(key, inp, oup, eps=1e-5):
    """Deterministic conv + eval-mode BN params, with BN folded into weight/bias."""
    ks = jax.random.split(key, 10)

    def conv_bn(kw, kg, kb, km, kv):
        w = jax.random.normal(kw, (oup, inp), jnp.float32) * 0.1      # 1x1 conv (O, C)
        gamma = 1.0 + 0.1 * jax.random.normal(kg, (oup,), jnp.float32)
        beta = 0.1 * jax.random.normal(kb, (oup,), jnp.float32)
        mean = 0.1 * jax.random.normal(km, (oup,), jnp.float32)
        var = jnp.abs(jax.random.normal(kv, (oup,), jnp.float32)) + 0.5
        scale = gamma / jnp.sqrt(var + eps)
        wf = w * scale[:, None]                        # fold BN scale into weight
        bf = (beta - mean * scale).reshape(oup, 1)     # single bias
        return wf, bf

    w1f, b1 = conv_bn(*ks[0:5])
    w2f, b2 = conv_bn(*ks[5:10])
    return dict(w1f=w1f, b1=b1, w2f=w2f, b2=b2)


def reference(x_l, x_h, params):
    """Plain-JAX f32 reference (conv+BN -> bilinear upsample -> add), NCHW."""
    B, C, H, W = x_l.shape
    _, _, h, w = x_h.shape
    mh = jnp.asarray(bilinear_matrix(H, h))
    mw = jnp.asarray(bilinear_matrix(W, w))
    inp = jnp.einsum('oc,bchw->bohw', params['w1f'], x_l) \
        + params['b1'].reshape(1, -1, 1, 1)
    ker = jnp.einsum('oc,bchw->bohw', params['w2f'], x_h) \
        + params['b2'].reshape(1, -1, 1, 1)
    up = jnp.einsum('Hh,bohw->boHw', mh, ker)
    up = jnp.einsum('Ww,boHw->boHW', mw, up)
    return inp + up


if __name__ == "__main__":
    key = jax.random.PRNGKey(0)
    k_xl, k_xh, k_p = jax.random.split(key, 3)

    B, C_in, C_out = 2, 4, 8
    H = W = 16          # x_l spatial
    h = w = 8           # x_h spatial (lower resolution, gets upsampled)

    x_l = jax.random.normal(k_xl, (B, C_in, H, W), jnp.float32)   # NCHW like PyTorch
    x_h = jax.random.normal(k_xh, (B, C_in, h, w), jnp.float32)
    params = make_params(k_p, C_in, C_out)

    ref = jax.block_until_ready(reference(x_l, x_h, params))

    # Exercise the spatially-tiled grid (2 lane-aligned tiles per image) ...
    out_tiled = jax.block_until_ready(fuse_block_sum(x_l, x_h, params, tile_sp=128))
    # ... and the auto-picked tiling (single full-width tile at these sizes).
    out_auto = jax.block_until_ready(fuse_block_sum(x_l, x_h, params))

    assert out_tiled.shape == (B, C_out, H, W)
    assert out_auto.shape == (B, C_out, H, W)
    # bf16 input/weight quantization (f32 accumulation) -> loosened tolerance.
    np.testing.assert_allclose(np.asarray(out_tiled), np.asarray(ref), rtol=2e-2, atol=2e-2)
    np.testing.assert_allclose(np.asarray(out_auto), np.asarray(ref), rtol=2e-2, atol=2e-2)

    print("KERNEL_OK")
</pallas_src>

<mosaic_0001>
module attributes {stable_mosaic.version = 11 : i64} {
  func.func @_fuse_block_sum_kernel(%arg0: i32, %arg1: i32, %arg2: memref<1x4x128xbf16, #tpu.memory_space<vmem>>, %arg3: memref<1x4x64xbf16, #tpu.memory_space<vmem>>, %arg4: memref<8x4xbf16, #tpu.memory_space<vmem>>, %arg5: memref<8x1xf32, #tpu.memory_space<vmem>>, %arg6: memref<8x4xbf16, #tpu.memory_space<vmem>>, %arg7: memref<8x1xf32, #tpu.memory_space<vmem>>, %arg8: memref<64x128xbf16, #tpu.memory_space<vmem>>, %arg9: memref<1x8x128xf32, #tpu.memory_space<vmem>>, %arg10: memref<8x64xbf16, #tpu.memory_space<vmem>>) attributes {dimension_semantics = [#tpu.dimension_semantics<parallel>, #tpu.dimension_semantics<arbitrary>], iteration_bounds = array<i64: 2, 2>, scalar_prefetch = 0 : i64, scratch_operands = 1 : i64, tpu.core_type = #tpu.core_type<tc>, window_params = [{transform_indices = @transform_0, window_bounds = array<i64: 1, 4, 128>}, {transform_indices = @transform_1, window_bounds = array<i64: 1, 4, 64>}, {pipeline_mode = #tpu.pipeline_mode<synchronous>, transform_indices = @transform_2, window_bounds = array<i64: 8, 4>}, {pipeline_mode = #tpu.pipeline_mode<synchronous>, transform_indices = @transform_3, window_bounds = array<i64: 8, 1>}, {pipeline_mode = #tpu.pipeline_mode<synchronous>, transform_indices = @transform_4, window_bounds = array<i64: 8, 4>}, {pipeline_mode = #tpu.pipeline_mode<synchronous>, transform_indices = @transform_5, window_bounds = array<i64: 8, 1>}, {transform_indices = @transform_6, window_bounds = array<i64: 64, 128>}, {transform_indices = @transform_7, window_bounds = array<i64: 1, 8, 128>}]} {
    %c0_i32 = arith.constant 0 : i32
    %0 = arith.cmpi eq, %arg1, %c0_i32 : i32
    %1 = arith.extui %0 : i1 to i32
    %c0_i32_0 = arith.constant 0 : i32
    %2 = arith.cmpi ne, %1, %c0_i32_0 : i32
    scf.if %2 {
      %c0_15 = arith.constant 0 : index
      %c0_16 = arith.constant 0 : index
      %17 = vector.load %arg6[%c0_15, %c0_16] : memref<8x4xbf16, #tpu.memory_space<vmem>>, vector<8x4xbf16>
      %c0_17 = arith.constant 0 : index
      %c0_18 = arith.constant 0 : index
      %c0_19 = arith.constant 0 : index
      %18 = vector.load %arg3[%c0_17, %c0_18, %c0_19] : memref<1x4x64xbf16, #tpu.memory_space<vmem>>, vector<1x4x64xbf16>
      %19 = vector.shape_cast %18 : vector<1x4x64xbf16> to vector<4x64xbf16>
      %cst_20 = arith.constant dense<0.000000e+00> : vector<8x64xf32>
      %20 = tpu.matmul %17, %19, %cst_20 {dimension_numbers = #tpu.dot_dimension_numbers<[1], [0], [0], [1], [0, 0, 1, 1], [], []>} : vector<8x4xbf16>, vector<4x64xbf16>, vector<8x64xf32> -> vector<8x64xf32>
      %c0_21 = arith.constant 0 : index
      %c0_22 = arith.constant 0 : index
      %21 = vector.load %arg7[%c0_21, %c0_22] : memref<8x1xf32, #tpu.memory_space<vmem>>, vector<8x1xf32>
      %22 = vector.broadcast %21 : vector<8x1xf32> to vector<8x64xf32>
      %23 = arith.addf %20, %22 : vector<8x64xf32>
      %24 = arith.truncf %23 : vector<8x64xf32> to vector<8x64xbf16>
      %c0_23 = arith.constant 0 : index
      %c0_24 = arith.constant 0 : index
      %25 = vector.load %arg10[%c0_23, %c0_24] : memref<8x64xbf16, #tpu.memory_space<vmem>>, vector<8x64xbf16>
      tpu.vector_store %arg10[%c0_23, %c0_24], %24 {strides = array<i32>} : memref<8x64xbf16, #tpu.memory_space<vmem>>, vector<8x64xbf16>,
    } else {
    }
    %c0 = arith.constant 0 : index
    %c0_1 = arith.constant 0 : index
    %3 = vector.load %arg4[%c0, %c0_1] : memref<8x4xbf16, #tpu.memory_space<vmem>>, vector<8x4xbf16>
    %c0_2 = arith.constant 0 : index
    %c0_3 = arith.constant 0 : index
    %c0_4 = arith.constant 0 : index
    %4 = vector.load %arg2[%c0_2, %c0_3, %c0_4] : memref<1x4x128xbf16, #tpu.memory_space<vmem>>, vector<1x4x128xbf16>
    %5 = vector.shape_cast %4 : vector<1x4x128xbf16> to vector<4x128xbf16>
    %cst = arith.constant dense<0.000000e+00> : vector<8x128xf32>
    %6 = tpu.matmul %3, %5, %cst {dimension_numbers = #tpu.dot_dimension_numbers<[1], [0], [0], [1], [0, 0, 1, 1], [], []>} : vector<8x4xbf16>, vector<4x128xbf16>, vector<8x128xf32> -> vector<8x128xf32>
    %c0_5 = arith.constant 0 : index
    %c0_6 = arith.constant 0 : index
    %7 = vector.load %arg5[%c0_5, %c0_6] : memref<8x1xf32, #tpu.memory_space<vmem>>, vector<8x1xf32>
    %8 = vector.broadcast %7 : vector<8x1xf32> to vector<8x128xf32>
    %9 = arith.addf %6, %8 : vector<8x128xf32>
    %c0_7 = arith.constant 0 : index
    %c0_8 = arith.constant 0 : index
    %10 = vector.load %arg10[%c0_7, %c0_8] : memref<8x64xbf16, #tpu.memory_space<vmem>>, vector<8x64xbf16>
    %c0_9 = arith.constant 0 : index
    %c0_10 = arith.constant 0 : index
    %11 = vector.load %arg8[%c0_9, %c0_10] : memref<64x128xbf16, #tpu.memory_space<vmem>>, vector<64x128xbf16>
    %cst_11 = arith.constant dense<0.000000e+00> : vector<8x128xf32>
    %12 = tpu.matmul %10, %11, %cst_11 {dimension_numbers = #tpu.dot_dimension_numbers<[1], [0], [0], [1], [0, 0, 1, 1], [], []>} : vector<8x64xbf16>, vector<64x128xbf16>, vector<8x128xf32> -> vector<8x128xf32>
    %13 = arith.addf %9, %12 : vector<8x128xf32>
    %c0_12 = arith.constant 0 : index
    %c0_13 = arith.constant 0 : index
    %c0_14 = arith.constant 0 : index
    %14 = vector.load %arg9[%c0_12, %c0_13, %c0_14] : memref<1x8x128xf32, #tpu.memory_space<vmem>>, vector<1x8x128xf32>
    %15 = vector.shape_cast %14 : vector<1x8x128xf32> to vector<8x128xf32>
    %16 = vector.shape_cast %13 : vector<8x128xf32> to vector<1x8x128xf32>
    tpu.vector_store %arg9[%c0_12, %c0_13, %c0_14], %16 {strides = array<i32>} : memref<1x8x128xf32, #tpu.memory_space<vmem>>, vector<1x8x128xf32>,
    return
  }
  func.func @transform_0(%arg0: i32, %arg1: i32) -> (i32, i32, i32) {
    %c0_i32 = arith.constant 0 : i32
    %c0_i32_0 = arith.constant 0 : i32
    return %arg0, %c0_i32, %arg1 : i32, i32, i32
  }
  func.func @transform_1(%arg0: i32, %arg1: i32) -> (i32, i32, i32) {
    %c0_i32 = arith.constant 0 : i32
    %c0_i32_0 = arith.constant 0 : i32
    %c0_i32_1 = arith.constant 0 : i32
    return %arg0, %c0_i32, %c0_i32_0 : i32, i32, i32
  }
  func.func @transform_2(%arg0: i32, %arg1: i32) -> (i32, i32) {
    %c0_i32 = arith.constant 0 : i32
    %c0_i32_0 = arith.constant 0 : i32
    %c0_i32_1 = arith.constant 0 : i32
    return %c0_i32, %c0_i32_0 : i32, i32
  }
  func.func @transform_3(%arg0: i32, %arg1: i32) -> (i32, i32) {
    %c0_i32 = arith.constant 0 : i32
    %c0_i32_0 = arith.constant 0 : i32
    %c0_i32_1 = arith.constant 0 : i32
    return %c0_i32, %c0_i32_0 : i32, i32
  }
  func.func @transform_4(%arg0: i32, %arg1: i32) -> (i32, i32) {
    %c0_i32 = arith.constant 0 : i32
    %c0_i32_0 = arith.constant 0 : i32
    %c0_i32_1 = arith.constant 0 : i32
    return %c0_i32, %c0_i32_0 : i32, i32
  }
  func.func @transform_5(%arg0: i32, %arg1: i32) -> (i32, i32) {
    %c0_i32 = arith.constant 0 : i32
    %c0_i32_0 = arith.constant 0 : i32
    %c0_i32_1 = arith.constant 0 : i32
    return %c0_i32, %c0_i32_0 : i32, i32
  }
  func.func @transform_6(%arg0: i32, %arg1: i32) -> (i32, i32) {
    %c0_i32 = arith.constant 0 : i32
    %c0_i32_0 = arith.constant 0 : i32
    return %c0_i32, %arg1 : i32, i32
  }
  func.func @transform_7(%arg0: i32, %arg1: i32) -> (i32, i32, i32) {
    %c0_i32 = arith.constant 0 : i32
    %c0_i32_0 = arith.constant 0 : i32
    return %arg0, %c0_i32, %arg1 : i32, i32, i32
  }
}

</mosaic_0001>

<llo_original>
// kernel: tpu_custom_call.1
$region0: #{tpu_custom_call.1}
  #allocation0 [shape = 'u32[]', space=smem, size = 0x4, offset = 0x4, fixed_abs, tag = 'smem constant byte address 0x4 - core index']
  #allocation1 [shape = 'u32[144,128]{1,0:T(1,128)}', space=vmem, size = 0x12000, scoped, tag = 'internal scratch']
  #allocation2 [shape = 'bf16[8,64]{1,0:T(8,128)(2,1)}', space=vmem, size = 0x800, scoped, tag = 'scratch operand']
  %s0 = inlined_call_operand.vmem [shape: bf16[2,4,256], index: 0, kind: input, shape index: {}]
  %s1 = inlined_call_operand.vmem [shape: bf16[2,4,64], index: 1, kind: input, shape index: {}]
  %s2 = inlined_call_operand.vmem [shape: bf16[8,4], index: 2, kind: input, shape index: {}]
  %s3 = inlined_call_operand.vmem [shape: f32[8,1], index: 3, kind: input, shape index: {}]
  %s4 = inlined_call_operand.vmem [shape: bf16[8,4], index: 4, kind: input, shape index: {}]
  %s5 = inlined_call_operand.vmem [shape: f32[8,1], index: 5, kind: input, shape index: {}]
  %s6 = inlined_call_operand.hbm [shape: bf16[64,256], index: 6, kind: input, shape index: {}]
  %s7 = inlined_call_operand.hbm [shape: f32[2,8,256], index: 7, kind: output, shape index: {}]
  %s8 = sld [smem:[#allocation0]]
  $region69: #{tpu_custom_call.1} parent=0
    _
  %s10 = ssub.s32 1, %s8
  %s11 = scalar_select 0, %s10, %s8
  $region1: #{tpu_custom_call.1} parent=0
    #allocation3 [shape = 'u8[32768]{0}', space=vmem, size = 0x8000, scoped, tag = 'input window, operand 6']
    #allocation4 [shape = 's32[2]{0}', space=sflag, size = 0x8, scoped, tag = 'scoped memory for tpu_custom_call.1']
    #allocation5 [shape = 's32[2]{0}', space=sflag, size = 0x8, scoped, tag = 'scoped memory for tpu_custom_call.1']
    #allocation6 [shape = 'u8[8192]{0}', space=vmem, size = 0x2000, scoped, tag = 'output window, operand 0']
    %12 = vsyncpa [#allocation4], 0
    %s13 = scalar_lea.sflag [#allocation4], 1
    %14 = vsyncpa %s13, 0
    %15 = vsyncpa [#allocation5], 0
    %s16 = scalar_lea.sflag [#allocation5], 1
    %17 = vsyncpa %s16, 0
    loop: start=0, step=1, limit=6
    $region2: #{tpu_custom_call.1} parent=1 // loop_pre_header
      _
    $region3: #{tpu_custom_call.1} parent=1 // loop_header
      %s19 = sphi 0, %s23
      %p20 = scmp.ge.s32.totalorder %s19, 6
      %s26 = sphi 0, %s38
      %s27 = sphi 0, %s34
      %s28 = sphi 0, %s26
      %s29 = sphi 0, %s27
      %s30 = sphi 0, %s28
      %s31 = sphi 0, %s29
      %s43 = sphi 0, %s45
      %s46 = sphi 0, %s43
      %s47 = sphi 0, %s46
      %s63 = sphi 0, %s47
      %s69 = sphi 0, %s71
      %s72 = sphi 0, %s69
      %s73 = sphi 0, %s72
      %s89 = sphi 0, %s73
      %s93 = sphi 0, %s93
      %s95 = sphi 0, %s93
      %s96 = sphi 0, %s95
      %s110 = sphi 0, %s96
      %s114 = sphi 0, %s114
      %s116 = sphi 0, %s114
      %s117 = sphi 0, %s116
      %s131 = sphi 0, %s117
      %s135 = sphi 0, %s135
      %s137 = sphi 0, %s135
      %s138 = sphi 0, %s137
      %s152 = sphi 0, %s138
      %s156 = sphi 0, %s156
      %s158 = sphi 0, %s156
      %s159 = sphi 0, %s158
      %s173 = sphi 0, %s159
      %s179 = sphi 0, %s181
      %s182 = sphi 0, %s179
      %s183 = sphi 0, %s182
      %s199 = sphi 0, %s183
      %s207 = sphi 0, %s209
      %s210 = sphi 0, %s207
      %s211 = sphi 0, %s210
      %s227 = sphi 0, %s211
    $region4: #{tpu_custom_call.1} parent=1 // loop_header_branch
      %22 = sbr.rel (%p20) target = $region8
    $region5: #{tpu_custom_call.1} parent=1 // loop_body
      %s24 = ssub.s32 %s19, 1
      %s25 = ssub.s32 %s19, 2
      %s32 = sadd.s32 1, %s27
      %p33 = scmp.ge.s32.totalorder %s32, 2
      %s34 = scalar_select %p33, 0, %s32
      %s35 = sadd.s32 1, %s26
      %s36 = scalar_select %p33, %s35, %s26
      %p37 = scmp.ge.s32.totalorder %s36, 2
      %s38 = scalar_select %p37, 0, %s36
      %s39 = ssub.s32 %s26, %s38
      %s40 = ssub.s32 %s27, %s34
      %s41 = sor.u32 %s39, %s40
      %p42 = scmp.eq.s32.totalorder %s41, 0
      %s44 = sadd.s32 %s43, 1
      %s45 = scalar_select %p42, %s43, %s44
      %p48 = pneg %p42
      %p49 = scmp.eq.s32.totalorder %s19, 3
      %p50 = por %p48, %p49
      %p51 = scmp.ne.s32.totalorder %s43, %s46
      %p52 = scmp.eq.s32.totalorder %s19, 0
      %p53 = por %p51, %p52
      %p54 = scmp.ne.s32.totalorder %s43, %s46
      %p55 = scmp.eq.s32.totalorder %s24, 3
      %p56 = por %p54, %p55
      %p57 = scmp.ne.s32.totalorder %s46, %s47
      %p58 = scmp.eq.s32.totalorder %s24, 0
      %p59 = por %p57, %p58
      %p60 = scmp.ne.s32.totalorder %s46, %s47
      %p61 = scmp.eq.s32.totalorder %s25, 3
      %p62 = por %p60, %p61
      %p64 = scmp.ne.s32.totalorder %s47, %s63
      %p65 = scmp.eq.s32.totalorder %s25, 0
      %p66 = por %p64, %p65
      %s67 = ssub.s32 %s26, %s38
      %p68 = scmp.eq.s32.totalorder %s67, 0
      %s70 = sadd.s32 %s69, 1
      %s71 = scalar_select %p68, %s69, %s70
      %p74 = pneg %p68
      %p75 = scmp.eq.s32.totalorder %s19, 3
      %p76 = por %p74, %p75
      %p77 = scmp.ne.s32.totalorder %s69, %s72
      %p78 = scmp.eq.s32.totalorder %s19, 0
      %p79 = por %p77, %p78
      %p80 = scmp.ne.s32.totalorder %s69, %s72
      %p81 = scmp.eq.s32.totalorder %s24, 3
      %p82 = por %p80, %p81
      %p83 = scmp.ne.s32.totalorder %s72, %s73
      %p84 = scmp.eq.s32.totalorder %s24, 0
      %p85 = por %p83, %p84
      %p86 = scmp.ne.s32.totalorder %s72, %s73
      %p87 = scmp.eq.s32.totalorder %s25, 3
      %p88 = por %p86, %p87
      %p90 = scmp.ne.s32.totalorder %s73, %s89
      %p91 = scmp.eq.s32.totalorder %s25, 0
      %p92 = por %p90, %p91
      %s94 = sadd.s32 %s93, 1
      %p97 = scmp.eq.s32.totalorder %s19, 3
      %p98 = scmp.ne.s32.totalorder %s93, %s95
      %p99 = scmp.eq.s32.totalorder %s19, 0
      %p100 = por %p98, %p99
      %p101 = scmp.ne.s32.totalorder %s93, %s95
      %p102 = scmp.eq.s32.totalorder %s24, 3
      %p103 = por %p101, %p102
      %p104 = scmp.ne.s32.totalorder %s95, %s96
      %p105 = scmp.eq.s32.totalorder %s24, 0
      %p106 = por %p104, %p105
      %p107 = scmp.ne.s32.totalorder %s95, %s96
      %p108 = scmp.eq.s32.totalorder %s25, 3
      %p109 = por %p107, %p108
      %p111 = scmp.ne.s32.totalorder %s96, %s110
      %p112 = scmp.eq.s32.totalorder %s25, 0
      %p113 = por %p111, %p112
      %s115 = sadd.s32 %s114, 1
      %p118 = scmp.eq.s32.totalorder %s19, 3
      %p119 = scmp.ne.s32.totalorder %s114, %s116
      %p120 = scmp.eq.s32.totalorder %s19, 0
      %p121 = por %p119, %p120
      %p122 = scmp.ne.s32.totalorder %s114, %s116
      %p123 = scmp.eq.s32.totalorder %s24, 3
      %p124 = por %p122, %p123
      %p125 = scmp.ne.s32.totalorder %s116, %s117
      %p126 = scmp.eq.s32.totalorder %s24, 0
      %p127 = por %p125, %p126
      %p128 = scmp.ne.s32.totalorder %s116, %s117
      %p129 = scmp.eq.s32.totalorder %s25, 3
      %p130 = por %p128, %p129
      %p132 = scmp.ne.s32.totalorder %s117, %s131
      %p133 = scmp.eq.s32.totalorder %s25, 0
      %p134 = por %p132, %p133
      %s136 = sadd.s32 %s135, 1
      %p139 = scmp.eq.s32.totalorder %s19, 3
      %p140 = scmp.ne.s32.totalorder %s135, %s137
      %p141 = scmp.eq.s32.totalorder %s19, 0
      %p142 = por %p140, %p141
      %p143 = scmp.ne.s32.totalorder %s135, %s137
      %p144 = scmp.eq.s32.totalorder %s24, 3
      %p145 = por %p143, %p144
      %p146 = scmp.ne.s32.totalorder %s137, %s138
      %p147 = scmp.eq.s32.totalorder %s24, 0
      %p148 = por %p146, %p147
      %p149 = scmp.ne.s32.totalorder %s137, %s138
      %p150 = scmp.eq.s32.totalorder %s25, 3
      %p151 = por %p149, %p150
      %p153 = scmp.ne.s32.totalorder %s138, %s152
      %p154 = scmp.eq.s32.totalorder %s25, 0
      %p155 = por %p153, %p154
      %s157 = sadd.s32 %s156, 1
      %p160 = scmp.eq.s32.totalorder %s19, 3
      %p161 = scmp.ne.s32.totalorder %s156, %s158
      %p162 = scmp.eq.s32.totalorder %s19, 0
      %p163 = por %p161, %p162
      %p164 = scmp.ne.s32.totalorder %s156, %s158
      %p165 = scmp.eq.s32.totalorder %s24, 3
      %p166 = por %p164, %p165
      %p167 = scmp.ne.s32.totalorder %s158, %s159
      %p168 = scmp.eq.s32.totalorder %s24, 0
      %p169 = por %p167, %p168
      %p170 = scmp.ne.s32.totalorder %s158, %s159
      %p171 = scmp.eq.s32.totalorder %s25, 3
      %p172 = por %p170, %p171
      %p174 = scmp.ne.s32.totalorder %s159, %s173
      %p175 = scmp.eq.s32.totalorder %s25, 0
      %p176 = por %p174, %p175
      %s177 = ssub.s32 %s27, %s34
      %p178 = scmp.eq.s32.totalorder %s177, 0
      %s180 = sadd.s32 %s179, 1
      %s181 = scalar_select %p178, %s179, %s180
      %p184 = pneg %p178
      %p185 = scmp.eq.s32.totalorder %s19, 3
      %p186 = por %p184, %p185
      %p187 = scmp.ne.s32.totalorder %s179, %s182
      %p188 = scmp.eq.s32.totalorder %s19, 0
      %p189 = por %p187, %p188
      %p190 = scmp.ne.s32.totalorder %s179, %s182
      %p191 = scmp.eq.s32.totalorder %s24, 3
      %p192 = por %p190, %p191
      %p193 = scmp.ne.s32.totalorder %s182, %s183
      %p194 = scmp.eq.s32.totalorder %s24, 0
      %p195 = por %p193, %p194
      %p196 = scmp.ne.s32.totalorder %s182, %s183
      %p197 = scmp.eq.s32.totalorder %s25, 3
      %p198 = por %p196, %p197
      %p200 = scmp.ne.s32.totalorder %s183, %s199
      %p201 = scmp.eq.s32.totalorder %s25, 0
      %p202 = por %p200, %p201
      %s203 = ssub.s32 %s26, %s38
      %s204 = ssub.s32 %s27, %s34
      %s205 = sor.u32 %s203, %s204
      %p206 = scmp.eq.s32.totalorder %s205, 0
      %s208 = sadd.s32 %s207, 1
      %s209 = scalar_select %p206, %s207, %s208
      %p212 = pneg %p206
      %p213 = scmp.eq.s32.totalorder %s19, 3
      %p214 = por %p212, %p213
      %p215 = scmp.ne.s32.totalorder %s207, %s210
      %p216 = scmp.eq.s32.totalorder %s19, 0
      %p217 = por %p215, %p216
      %p218 = scmp.ne.s32.totalorder %s207, %s210
      %p219 = scmp.eq.s32.totalorder %s24, 3
      %p220 = por %p218, %p219
      %p221 = scmp.ne.s32.totalorder %s210, %s211
      %p222 = scmp.eq.s32.totalorder %s24, 0
      %p223 = por %p221, %p222
      %p224 = scmp.ne.s32.totalorder %s210, %s211
      %p225 = scmp.eq.s32.totalorder %s25, 3
      %p226 = por %p224, %p225
      %p228 = scmp.ne.s32.totalorder %s211, %s227
      %p229 = scmp.eq.s32.totalorder %s25, 0
      %p230 = por %p228, %p229
      %p231 = scmp.le.s32.totalorder 1, %s19
      %p232 = scmp.lt.s32.totalorder %s19, 5
      %p233 = pnand %p231, %p232
      %p234 = pneg %p233
      // Predicated region
      $region9: #{tpu_custom_call.1} parent=5 // pred_check
        _
      $region10: #{tpu_custom_call.1} parent=5 // pred_check_branch
        %236 = sbr.rel (%p233) target = $region12
      $region11: #{tpu_custom_call.1} parent=5 // pred_region
        %s237 = ssub.s32 %s19, 1
        // Predicated region
        $region13: #{tpu_custom_call.1} parent=11 // pred_check
          %p238 = pneg %p106
        $region14: #{tpu_custom_call.1} parent=11 // pred_check_branch
          %240 = sbr.rel (%p238) target = $region16
        $region15: #{tpu_custom_call.1} parent=11 // pred_region
          _
        $region16: #{tpu_custom_call.1} parent=11 // pred_fallthru
          _
        // Predicated region
        $region17: #{tpu_custom_call.1} parent=11 // pred_check
          %p241 = pneg %p127
        $region18: #{tpu_custom_call.1} parent=11 // pred_check_branch
          %243 = sbr.rel (%p241) target = $region20
        $region19: #{tpu_custom_call.1} parent=11 // pred_region
          _
        $region20: #{tpu_custom_call.1} parent=11 // pred_fallthru
          _
        // Predicated region
        $region21: #{tpu_custom_call.1} parent=11 // pred_check
          %p244 = pneg %p148
        $region22: #{tpu_custom_call.1} parent=11 // pred_check_branch
          %246 = sbr.rel (%p244) target = $region24
        $region23: #{tpu_custom_call.1} parent=11 // pred_region
          _
        $region24: #{tpu_custom_call.1} parent=11 // pred_fallthru
          _
        // Predicated region
        $region25: #{tpu_custom_call.1} parent=11 // pred_check
          %p247 = pneg %p169
        $region26: #{tpu_custom_call.1} parent=11 // pred_check_branch
          %249 = sbr.rel (%p247) target = $region28
        $region27: #{tpu_custom_call.1} parent=11 // pred_region
          _
        $region28: #{tpu_custom_call.1} parent=11 // pred_fallthru
          _
      $region12: #{tpu_custom_call.1} parent=5 // pred_fallthru
        _
      %p250 = scmp.lt.s32.totalorder %s19, 4
      // Predicated region
      $region29: #{tpu_custom_call.1} parent=5 // pred_check
        %p251 = pneg %p250
      $region30: #{tpu_custom_call.1} parent=5 // pred_check_branch
        %253 = sbr.rel (%p251) target = $region32
      $region31: #{tpu_custom_call.1} parent=5 // pred_region
        // Predicated region
        $region33: #{tpu_custom_call.1} parent=31 // pred_check
          %p254 = pneg %p53
        $region34: #{tpu_custom_call.1} parent=31 // pred_check_branch
          %256 = sbr.rel (%p254) target = $region36
        $region35: #{tpu_custom_call.1} parent=31 // pred_region
          %p257 = scmp.lt.s32.totalorder %s26, 1
          %s258 = scalar_select %p257, %s26, 1
          %p259 = scmp.lt.s32.totalorder %s27, 1
          %s260 = scalar_select %p259, %s27, 1
          %s261 = smul.addr %s258, 2
          %s262 = sadd.s32 %s260, %s261
          %s263 = smul.addr %s262, 2
          %s264 = scalar_lea.vmem %s0, %s263
        $region36: #{tpu_custom_call.1} parent=31 // pred_fallthru
          _
        // Predicated region
        $region37: #{tpu_custom_call.1} parent=31 // pred_check
          %p265 = pneg %p79
        $region38: #{tpu_custom_call.1} parent=31 // pred_check_branch
          %267 = sbr.rel (%p265) target = $region40
        $region39: #{tpu_custom_call.1} parent=31 // pred_region
          %p268 = scmp.lt.s32.totalorder %s26, 1
          %s269 = scalar_select %p268, %s26, 1
          %s270 = smul.addr %s269, 2
          %s271 = scalar_lea.vmem %s1, %s270
        $region40: #{tpu_custom_call.1} parent=31 // pred_fallthru
          _
        // Predicated region
        $region41: #{tpu_custom_call.1} parent=31 // pred_check
          %p272 = pneg %p189
        $region42: #{tpu_custom_call.1} parent=31 // pred_check_branch
          %274 = sbr.rel (%p272) target = $region44
        $region43: #{tpu_custom_call.1} parent=31 // pred_region
          %s275 = sand.u32 %s179, 1
          %s276 = scalar_lea.sflag [#allocation4], %s275
          %s277 = sand.u32 %s179, 1
          %s278 = smul.addr %s277, 32
          %s279 = scalar_lea.vmem [#allocation3], %s278
          %s281 = ssub.s32 512, 512
          %282 = vsyncadd %s276, %s281
          %s283 = smul.addr %s27, 64
          %s284 = scalar_lea.hbm %s6, %s283
          %s285 = sshll.u32 %s279, 4
          %s286 = int_to_ptr.vmem [resolvable:$true] %s285
          %291 = dma.hbm_to_vmem [thread:$0]  %s284, 512, %s286, %s276, 128, 64, 4
        $region44: #{tpu_custom_call.1} parent=31 // pred_fallthru
          _
      $region32: #{tpu_custom_call.1} parent=5 // pred_fallthru
        _
      %p292 = scmp.le.s32.totalorder 1, %s19
      %p293 = scmp.lt.s32.totalorder %s19, 5
      %p294 = pnand %p292, %p293
      %p295 = pneg %p294
      // Predicated region
      $region45: #{tpu_custom_call.1} parent=5 // pred_check
        _
      $region46: #{tpu_custom_call.1} parent=5 // pred_check_branch
        %297 = sbr.rel (%p294) target = $region48
      $region47: #{tpu_custom_call.1} parent=5 // pred_region
        %s298 = ssub.s32 %s19, 1
        %s299 = sand.u32 %s182, 1
        %s300 = scalar_lea.sflag [#allocation4], %s299
        %s301 = sand.u32 %s182, 1
        %s302 = smul.addr %s301, 32
        %s303 = scalar_lea.vmem [#allocation3], %s302
        // Predicated region
        $region49: #{tpu_custom_call.1} parent=47 // pred_check
          %p304 = pneg %p195
        $region50: #{tpu_custom_call.1} parent=47 // pred_check_branch
          %306 = sbr.rel (%p304) target = $region52
        $region51: #{tpu_custom_call.1} parent=47 // pred_region
          %307 = dma.done %s300, 512
        $region52: #{tpu_custom_call.1} parent=47 // pred_fallthru
          _
        %p308 = scmp.lt.s32.totalorder %s28, 1
        %s309 = scalar_select %p308, %s28, 1
        %p310 = scmp.lt.s32.totalorder %s29, 1
        %s311 = scalar_select %p310, %s29, 1
        %s312 = smul.addr %s309, 2
        %s313 = sadd.s32 %s311, %s312
        %s314 = smul.addr %s313, 2
        %s315 = scalar_lea.vmem %s0, %s314
        %p316 = pneg %p59
        %p317 = pneg %p56
        %p318 = scmp.lt.s32.totalorder %s28, 1
        %s319 = scalar_select %p318, %s28, 1
        %s320 = smul.addr %s319, 2
        %s321 = scalar_lea.vmem %s1, %s320
        %p322 = pneg %p85
        %p323 = pneg %p82
        %p324 = pneg %p106
        %p325 = pneg %p103
        %p326 = pneg %p127
        %p327 = pneg %p124
        %p328 = pneg %p148
        %p329 = pneg %p145
        %p330 = pneg %p169
        %p331 = pneg %p166
        %s332 = sand.u32 %s182, 1
        %s333 = scalar_lea.sflag [#allocation4], %s332
        %s334 = sand.u32 %s182, 1
        %s335 = smul.addr %s334, 32
        %s336 = scalar_lea.vmem [#allocation3], %s335
        %p337 = pneg %p195
        %p338 = pneg %p192
        %p339 = pneg %p223
        %p340 = pneg %p220
        %s341 = sand.u32 %s210, 1
        %s342 = scalar_lea.sflag [#allocation5], %s341
        %s343 = sand.u32 %s210, 1
        %s344 = smul.addr %s343, 8
        %s345 = scalar_lea.vmem [#allocation6], %s344
        %p346 = scmp.lt.s32.totalorder %s28, 1
        %s347 = scalar_select %p346, %s28, 1
        %p348 = scmp.lt.s32.totalorder %s29, 1
        %s349 = scalar_select %p348, %s29, 1
        %s350 = smul.addr %s347, 2
        %s351 = sadd.s32 %s349, %s350
        %s352 = smul.addr %s351, 2
        %s353 = scalar_lea.vmem %s0, %s352
        %p354 = scmp.lt.s32.totalorder %s28, 1
        %s355 = scalar_select %p354, %s28, 1
        %s356 = smul.addr %s355, 2
        %s357 = scalar_lea.vmem %s1, %s356
        %p359 = scmp.eq.s32.totalorder %s29, 0
        // Predicated region
        $region53: #{tpu_custom_call.1} parent=47 // pred_check
          %p360 = pneg %p359
        $region54: #{tpu_custom_call.1} parent=47 // pred_check_branch
          %362 = sbr.rel (%p360) target = $region56
        $region55: #{tpu_custom_call.1} parent=47 // pred_region
          %v363 = vld [vmem:[%s4] sm:$0xf]
          %v364 = vld [vmem:[%s357] sm:$0x3]
          %v365 = vld [vmem:[%s5] sm:$0xff]
          %367 = vset.pattern.permute.xlu0 0
          %368 = vperm.xlu0 %367, %v365
          %v369 = vpop.permute.xlu0 %368
          %vm371 = vcmask 31744
          %v373 = vsel %vm371, %v363, 0
          %vm375 = vcmask 1041408
          %v377 = vsel %vm375, %v364, 0
          %379 = vmatprep.subr.bf16.mxu0 0
          %380 = vmatpush1.bf16.msra.mxu0 %v377
          %381 = vmatprep.subr.bf16.mxu0 0
          %382 = vmatpush1.bf16.msra.mxu0 0
          %383 = vmatprep.subr.bf16.mxu0 0
          %384 = vmatpush1.bf16.msra.mxu0 0
          %385 = vmatprep.subr.bf16.mxu0 0
          %386 = vmatpush1.bf16.msra.mxu0 0
          %387 = vmatprep.subr.bf16.mxu0 0
          %388 = vmatpush1.bf16.msra.mxu0 0
          %389 = vmatprep.subr.bf16.mxu0 0
          %390 = vmatpush1.bf16.msra.mxu0 0
          %391 = vmatprep.subr.bf16.mxu0 0
          %392 = vmatpush1.bf16.msra.mxu0 0
          %393 = vmatprep.subr.bf16.mxu0 0
          %394 = vmatpush1.bf16.msra.mxu0 0
          %395 = vmatprep.subr.bf16.mxu0 0
          %396 = vmatpush1.bf16.msra.mxu0 0
          %397 = vmatprep.subr.bf16.mxu0 0
          %398 = vmatpush1.bf16.msra.mxu0 0
          %399 = vmatprep.subr.bf16.mxu0 0
          %400 = vmatpush1.bf16.msra.mxu0 0
          %401 = vmatprep.subr.bf16.mxu0 0
          %402 = vmatpush1.bf16.msra.mxu0 0
          %403 = vmatprep.subr.bf16.mxu0 0
          %404 = vmatpush1.bf16.msra.mxu0 0
          %405 = vmatprep.subr.bf16.mxu0 0
          %406 = vmatpush1.bf16.msra.mxu0 0
          %407 = vmatprep.subr.bf16.mxu0 0
          %408 = vmatpush1.bf16.msra.mxu0 0
          %409 = vmatprep.subr.bf16.mxu0 0
          %410 = vmatpush1.bf16.msra.mxu0 0
          %411 = vmatprep.mubr.bf16.mxu0 0
          %412 = vmatmul.mubr.bf16.gmra.mrb[0].mxu0 %v373
          %v413 = vpop.f32.mrb[0].mxu0
          %v414 = vadd.f32 %v369, %v413
          %v415 = vpop.f32.mrb[0].mxu0
          %v416 = vpop.f32.mrb[0].mxu0
          %v417 = vpop.f32.mrb[0].mxu0
          %418 = vdwg.mxu0
          %v419 = vpack.c.bf16 %v414, %v414
          %vm420 = vcmask 519168
          %421 = vst.msk [vmem:[#allocation2] sm:$0xf] %vm420, %v419
        $region56: #{tpu_custom_call.1} parent=47 // pred_fallthru
          _
        %v422 = vld [vmem:[%s2] sm:$0xf]
        %v423 = vld [vmem:[%s353] sm:$0x3]
        %v424 = vld [vmem:[%s3] sm:$0xff]
        %426 = vset.pattern.permute.xlu0 0
        %427 = vperm.xlu0 %426, %v424
        %v428 = vpop.permute.xlu0 %427
        %vm430 = vcmask 31744
        %v432 = vsel %vm430, %v422, 0
        %vm434 = vcmask 1041408
        %v436 = vsel %vm434, %v423, 0
        %438 = vmatprep.subr.bf16.mxu0 0
        %439 = vmatpush1.bf16.msra.mxu0 %v436
        %440 = vmatprep.subr.bf16.mxu0 0
        %441 = vmatpush1.bf16.msra.mxu0 0
        %442 = vmatprep.subr.bf16.mxu0 0
        %443 = vmatpush1.bf16.msra.mxu0 0
        %444 = vmatprep.subr.bf16.mxu0 0
        %445 = vmatpush1.bf16.msra.mxu0 0
        %446 = vmatprep.subr.bf16.mxu0 0
        %447 = vmatpush1.bf16.msra.mxu0 0
        %448 = vmatprep.subr.bf16.mxu0 0
        %449 = vmatpush1.bf16.msra.mxu0 0
        %450 = vmatprep.subr.bf16.mxu0 0
        %451 = vmatpush1.bf16.msra.mxu0 0
        %452 = vmatprep.subr.bf16.mxu0 0
        %453 = vmatpush1.bf16.msra.mxu0 0
        %454 = vmatprep.subr.bf16.mxu0 0
        %455 = vmatpush1.bf16.msra.mxu0 0
        %456 = vmatprep.subr.bf16.mxu0 0
        %457 = vmatpush1.bf16.msra.mxu0 0
        %458 = vmatprep.subr.bf16.mxu0 0
        %459 = vmatpush1.bf16.msra.mxu0 0
        %460 = vmatprep.subr.bf16.mxu0 0
        %461 = vmatpush1.bf16.msra.mxu0 0
        %462 = vmatprep.subr.bf16.mxu0 0
        %463 = vmatpush1.bf16.msra.mxu0 0
        %464 = vmatprep.subr.bf16.mxu0 0
        %465 = vmatpush1.bf16.msra.mxu0 0
        %466 = vmatprep.subr.bf16.mxu0 0
        %467 = vmatpush1.bf16.msra.mxu0 0
        %468 = vmatprep.subr.bf16.mxu0 0
        %469 = vmatpush1.bf16.msra.mxu0 0
        %470 = vmatprep.mubr.bf16.mxu0 0
        %471 = vmatmul.mubr.bf16.gmra.mrb[0].mxu0 %v432
        %v472 = vpop.f32.mrb[0].mxu0
        %v473 = vadd.f32 %v428, %v472
        %v474 = vpop.f32.mrb[0].mxu0
        %v475 = vpop.f32.mrb[0].mxu0
        %v476 = vpop.f32.mrb[0].mxu0
        %477 = vdwg.mxu0
        %v478 = vld [vmem:[#allocation2] sm:$0xf]
        %v479 = vld [vmem:[%s303] sm:$0xf]
        %v480 = vld [vmem:[%s303 + $0x4] sm:$0xf]
        %v481 = vld [vmem:[%s303 + $0x8] sm:$0xf]
        %v482 = vld [vmem:[%s303 + $0xc] sm:$0xf]
        %v483 = vld [vmem:[%s303 + $0x10] sm:$0xf]
        %v484 = vld [vmem:[%s303 + $0x14] sm:$0xf]
        %v485 = vld [vmem:[%s303 + $0x18] sm:$0xf]
        %v486 = vld [vmem:[%s303 + $0x1c] sm:$0xf]
        %v495 = vunpack.c.l.b16 %v479
        %v496 = vunpack.c.l.b16 %v480
        %v497 = vunpack.c.l.b16 %v481
        %v498 = vunpack.c.l.b16 %v482
        %v499 = vunpack.c.l.b16 %v483
        %v500 = vunpack.c.l.b16 %v484
        %v501 = vunpack.c.l.b16 %v485
        %v502 = vunpack.c.l.b16 %v486
        %v503 = vpack.c.b16 %v496, %v495
        %v504 = vpack.c.b16 %v498, %v497
        %v505 = vpack.c.b16 %v500, %v499
        %v506 = vpack.c.b16 %v502, %v501
        %vm511 = vcmask 523264
        %v513 = vsel %vm511, %v478, 0
        %515 = vmatprep.subr.bf16.mxu0 0
        %516 = vmatpush1.bf16.msra.mxu0 %v503
        %517 = vmatprep.subr.bf16.mxu0 0
        %518 = vmatpush1.bf16.msra.mxu0 %v504
        %519 = vmatprep.subr.bf16.mxu0 0
        %520 = vmatpush1.bf16.msra.mxu0 %v505
        %521 = vmatprep.subr.bf16.mxu0 0
        %522 = vmatpush1.bf16.msra.mxu0 %v506
        %523 = vmatprep.subr.bf16.mxu0 0
        %524 = vmatpush1.bf16.msra.mxu0 0
        %525 = vmatprep.subr.bf16.mxu0 0
        %526 = vmatpush1.bf16.msra.mxu0 0
        %527 = vmatprep.subr.bf16.mxu0 0
        %528 = vmatpush1.bf16.msra.mxu0 0
        %529 = vmatprep.subr.bf16.mxu0 0
        %530 = vmatpush1.bf16.msra.mxu0 0
        %531 = vmatprep.subr.bf16.mxu0 0
        %532 = vmatpush1.bf16.msra.mxu0 0
        %533 = vmatprep.subr.bf16.mxu0 0
        %534 = vmatpush1.bf16.msra.mxu0 0
        %535 = vmatprep.subr.bf16.mxu0 0
        %536 = vmatpush1.bf16.msra.mxu0 0
        %537 = vmatprep.subr.bf16.mxu0 0
        %538 = vmatpush1.bf16.msra.mxu0 0
        %539 = vmatprep.subr.bf16.mxu0 0
        %540 = vmatpush1.bf16.msra.mxu0 0
        %541 = vmatprep.subr.bf16.mxu0 0
        %542 = vmatpush1.bf16.msra.mxu0 0
        %543 = vmatprep.subr.bf16.mxu0 0
        %544 = vmatpush1.bf16.msra.mxu0 0
        %545 = vmatprep.subr.bf16.mxu0 0
        %546 = vmatpush1.bf16.msra.mxu0 0
        %547 = vmatprep.mubr.bf16.mxu0 0
        %548 = vmatmul.mubr.bf16.gmra.mrb[0].mxu0 %v513
        %v549 = vpop.f32.mrb[0].mxu0
        %v550 = vadd.f32 0.0, %v549
        %v551 = vpop.f32.mrb[0].mxu0
        %v552 = vpop.f32.mrb[0].mxu0
        %v553 = vpop.f32.mrb[0].mxu0
        %554 = vdwg.mxu0
        %v555 = vadd.f32 %v473, %v550
        %556 = vst [vmem:[%s345] sm:$0xff] %v555
        %s557 = sand.u32 %s210, 1
        %s558 = scalar_lea.sflag [#allocation5], %s557
        %s559 = sand.u32 %s210, 1
        %s560 = smul.addr %s559, 8
        %s561 = scalar_lea.vmem [#allocation6], %s560
        // Predicated region
        $region57: #{tpu_custom_call.1} parent=47 // pred_check
          %p562 = pneg %p220
        $region58: #{tpu_custom_call.1} parent=47 // pred_check_branch
          %564 = sbr.rel (%p562) target = $region60
        $region59: #{tpu_custom_call.1} parent=47 // pred_region
          %s566 = ssub.s32 128, 128
          %567 = vsyncadd %s558, %s566
          %s568 = smul.addr %s28, 2
          %s569 = sadd.s32 %s29, %s568
          %s570 = smul.addr %s569, 128
          %s571 = scalar_lea.hbm %s7, %s570
          %s573 = sshll.u32 %s561, 4
          %s574 = int_to_ptr.vmem [resolvable:$true] %s573
          %576 = dma.vmem_to_hbm [thread:$0]  %s574, 128, %s571, %s558
        $region60: #{tpu_custom_call.1} parent=47 // pred_fallthru
          _
      $region48: #{tpu_custom_call.1} parent=5 // pred_fallthru
        _
      %p577 = scmp.le.s32.totalorder 2, %s19
      // Predicated region
      $region61: #{tpu_custom_call.1} parent=5 // pred_check
        %p578 = pneg %p577
      $region62: #{tpu_custom_call.1} parent=5 // pred_check_branch
        %580 = sbr.rel (%p578) target = $region64
      $region63: #{tpu_custom_call.1} parent=5 // pred_region
        %s581 = ssub.s32 %s19, 2
        // Predicated region
        $region65: #{tpu_custom_call.1} parent=63 // pred_check
          %p582 = pneg %p226
        $region66: #{tpu_custom_call.1} parent=63 // pred_check_branch
          %584 = sbr.rel (%p582) target = $region68
        $region67: #{tpu_custom_call.1} parent=63 // pred_region
          %s585 = sand.u32 %s211, 1
          %s586 = scalar_lea.sflag [#allocation5], %s585
          %s587 = sand.u32 %s211, 1
          %s588 = smul.addr %s587, 8
          %s589 = scalar_lea.vmem [#allocation6], %s588
          %590 = dma.done %s586, 128
        $region68: #{tpu_custom_call.1} parent=63 // pred_fallthru
          _
      $region64: #{tpu_custom_call.1} parent=5 // pred_fallthru
        _
    $region6: #{tpu_custom_call.1} parent=1 // loop_footer
      %s23 = sadd.s32 1, %s19
    $region7: #{tpu_custom_call.1} parent=1 // loop_footer_branch
      %18 = sbr.rel target = $region3
    $region8: #{tpu_custom_call.1} parent=1 // loop_exit
      _
    %591 = vsyncpa [#allocation4], 1
    %s592 = scalar_lea.sflag [#allocation4], 1
    %593 = vsyncpa %s592, 1
    %594 = vsyncpa [#allocation5], 1
    %s595 = scalar_lea.sflag [#allocation5], 1
    %596 = vsyncpa %s595, 1

</llo_original>
